<compile_context>
chip_gen: v7x
topology: tpu7x:2x2x1
jax: 0.10.0
libtpu: 0.0.40
codegen_flags: <defaults>
</compile_context>

<pallas_src>
import functools
import math
import random as pyrandom

import jax
import jax.numpy as jnp
from jax.experimental import pallas as pl
from jax.experimental.pallas import tpu as pltpu


def _round_up(a, m):
    return -(-a // m) * m


def _tpu_memory_targets():
    """Generation-aware (target_block_bytes, vmem_limit_bytes)."""
    mib = 1024 * 1024
    try:
        cap = int(getattr(pltpu.get_tpu_info(), "vmem_capacity_bytes", 0) or 0)
    except Exception:
        cap = 0
    if cap <= 0 or cap <= 64 * mib:
        # v7x (64 MiB physical VMEM per core) or unknown -> conservative.
        return 6 * mib, 44 * mib
    # v5e / v6e: 128 MiB physical VMEM.
    return 8 * mib, 64 * mib


_TARGET_BLOCK_BYTES, _VMEM_LIMIT_BYTES = _tpu_memory_targets()
_BLOCK_FLOOR_BYTES = 1 * 1024 * 1024   # keep blocks >= ~1 MiB when splitting
_MIN_GRID_STEPS = 4                    # >= 2 grid steps per TensorCore on v7x


# ---------------------------------------------------------------------------
# Pallas kernel: for tensor j (= program_id(0)), zero lanes whose frequency
# index (col % spectrum_len) falls in [start_j, start_j + band_j) of a
# (1, tile_rows, width) block.  width % spectrum_len == 0, so the mask is
# row-invariant and a single (1, 1, width) row broadcasts over all sublanes.
# ---------------------------------------------------------------------------
def _freq_mask_kernel(params_ref, x_ref, o_ref, *, spectrum_len, width):
    j = pl.program_id(0)
    start = params_ref[2 * j]
    band = params_ref[2 * j + 1]

    col = jax.lax.broadcasted_iota(jnp.int32, (1, 1, width), 2)
    freq = col % spectrum_len                  # == col when width == spectrum_len
    in_band = (freq >= start) & (freq < start + band)

    x = x_ref[...]
    o_ref[...] = jnp.where(in_band, jnp.zeros((), dtype=x.dtype), x)


# ---------------------------------------------------------------------------
# Batched implementation: n identically-shaped tensors, one pallas_call.
# ---------------------------------------------------------------------------
@functools.partial(jax.jit, static_argnames=("spectrum_len", "width"))
def _freq_mask_group_impl(params, tensors, *, spectrum_len, width):
    n = len(tensors)
    x0 = tensors[0]
    dtype = x0.dtype
    rows = x0.size // width

    # Free reshapes (leading-dim collapse / lane regroup of contiguous data);
    # the stack for n > 1 is the only extra copy and it amortizes dispatch.
    if n == 1:
        x3 = x0.reshape(1, rows, width)
    else:
        x3 = jnp.stack([t.reshape(rows, width) for t in tensors], axis=0)

    itemsize = jnp.dtype(dtype).itemsize
    sublane = max(8, 32 // itemsize)           # 8 f32 / 16 bf16 / 32 int8
    bytes_per_row = _round_up(width, 128) * itemsize   # VMEM-layout-padded

    if rows <= sublane:
        tile_rows = rows                       # single (partial-vreg) block
    else:
        tile_rows = max(sublane,
                        (_TARGET_BLOCK_BYTES // bytes_per_row) // sublane * sublane)
        # Target >= _MIN_GRID_STEPS total grid steps (>= 2 per v7x TensorCore)
        # so the BlockSpec double-buffer pipelines, but keep blocks >= ~1 MiB.
        steps_per_tensor = -(-_MIN_GRID_STEPS // n)
        if steps_per_tensor > 1:
            rows_per_step = _round_up(-(-rows // steps_per_tensor), sublane)
            floor_rows = max(sublane,
                             (_BLOCK_FLOOR_BYTES // bytes_per_row) // sublane * sublane)
            tile_rows = min(tile_rows, max(rows_per_step, floor_rows))
        # Never exceed the tensor; partial last block is handled by Pallas.
        tile_rows = min(tile_rows, rows // sublane * sublane)

    grid = (n, pl.cdiv(rows, tile_rows))

    kernel = functools.partial(_freq_mask_kernel,
                               spectrum_len=spectrum_len, width=width)

    out3 = pl.pallas_call(
        kernel,
        out_shape=jax.ShapeDtypeStruct((n, rows, width), dtype),
        grid_spec=pltpu.PrefetchScalarGridSpec(
            num_scalar_prefetch=1,
            grid=grid,
            in_specs=[pl.BlockSpec((1, tile_rows, width),
                                   lambda j, r, p: (j, r, 0))],
            out_specs=pl.BlockSpec((1, tile_rows, width),
                                   lambda j, r, p: (j, r, 0)),
        ),
        compiler_params=pltpu.CompilerParams(
            dimension_semantics=("parallel", "parallel"),
            vmem_limit_bytes=_VMEM_LIMIT_BYTES,
        ),
    )(params, x3)

    if n == 1:
        return (out3.reshape(x0.shape),)
    return tuple(out3[j].reshape(tensors[j].shape) for j in range(n))


def freq_mask_group_pallas(tensors, bands):
    """Mask a group of identically-shaped tensors.

    tensors: sequence of arrays [..., s] with identical shape & dtype.
    bands:   sequence of (start_freq, band_width) host ints, one per tensor.
    """
    tensors = tuple(tensors)
    x0 = tensors[0]
    s = int(x0.shape[-1])
    total = int(x0.size)
    lane = s * (128 // math.gcd(s, 128))       # lcm(s, 128)
    width = lane if total % lane == 0 else s   # lane-dense fast path when free
    params = jnp.asarray([int(v) for band in bands for v in band],
                         dtype=jnp.int32)
    return _freq_mask_group_impl(params, tensors, spectrum_len=s, width=width)


def freq_mask_pallas(x, start_freq, band_width):
    """Zero the band [start_freq, start_freq + band_width) along the last axis."""
    return freq_mask_group_pallas((x,), [(start_freq, band_width)])[0]


# ---------------------------------------------------------------------------
# Module-equivalent wrapper (host-side glue mirrors FreqMaskAugmenter.forward)
# ---------------------------------------------------------------------------
class FreqMaskAugmenterPallas:
    def __init__(self, args):
        self.args = args
        self.config = args["dataset_config"]["freq_mask"]
        self.p = (
            1
            if args["train_mode"] == "predictive"
            and args["learn_framework"] == "MTSS"
            else self.config["prob"]
        )
        self.modalities = args["dataset_config"]["modality_names"]
        self.locations = args["dataset_config"]["location_names"]
        self.max_band_widths = {}
        for loc in self.locations:
            for mod in self.modalities:
                if mod not in self.max_band_widths:
                    self.max_band_widths[mod] = math.floor(
                        args["dataset_config"]["loc_mod_spectrum_len"][loc][mod]
                        * self.config["mask_ratio"]
                    )
                    assert self.max_band_widths[mod] > 1

    def forward(self, org_loc_inputs, labels):
        aug_loc_inputs = {loc: {} for loc in self.locations}
        aug_mod_labels = []
        b = None
        # Group masked tensors by (shape, dtype) so every group is one launch.
        groups = {}
        for loc in self.locations:
            for mod in self.modalities:
                x = org_loc_inputs[loc][mod]
                if b is None:
                    b = x.shape[0]
                if pyrandom.random() < self.p:
                    s = x.shape[-1]
                    band_width = pyrandom.randint(1, self.max_band_widths[mod])
                    band_width = min(band_width, s - 1)   # guard mask_ratio=1.0
                    # Matches torch.randint(0, s - band_width) (exclusive high).
                    start_freq = pyrandom.randint(0, s - band_width - 1)
                    key = (tuple(x.shape), str(x.dtype))
                    g = groups.setdefault(key,
                                          {"tensors": [], "bands": [], "slots": []})
                    g["tensors"].append(x)
                    g["bands"].append((start_freq, band_width))
                    g["slots"].append((loc, mod))
                    aug_mod_labels.append(1)
                else:
                    # Pass-through: no kernel launch, no HBM traffic
                    # (matches the original, which returns the input as-is).
                    aug_loc_inputs[loc][mod] = x
                    aug_mod_labels.append(0)
        for g in groups.values():
            outs = freq_mask_group_pallas(g["tensors"], g["bands"])
            for (loc, mod), out in zip(g["slots"], outs):
                aug_loc_inputs[loc][mod] = out
        aug_mod_labels = jnp.asarray(aug_mod_labels, dtype=jnp.float32)
        aug_mod_labels = jnp.tile(aug_mod_labels[None, :], (b, 1))
        return aug_loc_inputs, aug_mod_labels, labels


# ---------------------------------------------------------------------------
# Demo / self-test
# ---------------------------------------------------------------------------
if __name__ == "__main__":
    key = jax.random.PRNGKey(0)

    # --- Direct kernel checks -------------------------------------------
    # 1) Regular shape (lane-dense path, lcm(16,128)=128 divides total).
    key, sub = jax.random.split(key)
    x_a = jax.random.normal(sub, (2, 4, 8, 16), dtype=jnp.float32)
    y_a = jax.block_until_ready(freq_mask_pallas(x_a, 3, 5))
    ref_a = x_a.at[..., 3:8].set(0.0)
    assert bool(jnp.allclose(y_a, ref_a)), "direct kernel mismatch (regular shape)"

    # 2) Ragged shape (total not divisible by the lane width -> (R, s) path,
    #    zero padding / zero extra HBM passes).
    key, sub = jax.random.split(key)
    x_b = jax.random.normal(sub, (2, 3, 5, 16), dtype=jnp.float32)
    y_b = jax.block_until_ready(freq_mask_pallas(x_b, 0, 2))
    ref_b = x_b.at[..., 0:2].set(0.0)
    assert bool(jnp.allclose(y_b, ref_b)), "direct kernel mismatch (ragged shape)"

    # 3) s multiple of 128 (fast path: reshape to (b*c*i, s), no lane regroup).
    key, sub = jax.random.split(key)
    x_c = jax.random.normal(sub, (2, 2, 8, 128), dtype=jnp.float32)
    y_c = jax.block_until_ready(freq_mask_pallas(x_c, 40, 17))
    ref_c = x_c.at[..., 40:57].set(0.0)
    assert bool(jnp.allclose(y_c, ref_c)), "direct kernel mismatch (s=128)"

    # --- Full module check (exercises the batched n=2 launch) -------------
    b, c, i, s = 2, 4, 8, 16
    locations = ["loc1"]
    modalities = ["audio", "seismic"]

    args = {
        "train_mode": "predictive",
        "learn_framework": "MTSS",  # -> p = 1, masking always applied
        "dataset_config": {
            "freq_mask": {"prob": 0.5, "mask_ratio": 0.5},
            "modality_names": modalities,
            "location_names": locations,
            "loc_mod_spectrum_len": {"loc1": {"audio": s, "seismic": s}},
        },
    }

    org_loc_inputs = {"loc1": {}}
    for mod in modalities:
        key, sub = jax.random.split(key)
        org_loc_inputs["loc1"][mod] = jax.random.normal(
            sub, (b, c, i, s), dtype=jnp.float32
        )
    labels = jnp.arange(b, dtype=jnp.int32)

    aug = FreqMaskAugmenterPallas(args)

    pyrandom.seed(0)  # deterministic host-side band selection
    aug_inputs, aug_mod_labels, out_labels = aug.forward(org_loc_inputs, labels)
    jax.block_until_ready(aug_mod_labels)
    for loc in locations:
        for mod in modalities:
            jax.block_until_ready(aug_inputs[loc][mod])

    # Pure-JAX reference replaying the same host-side random choices.
    pyrandom.seed(0)
    ok = True
    for loc in locations:
        for mod in modalities:
            x = org_loc_inputs[loc][mod]
            if pyrandom.random() < aug.p:
                band_width = min(pyrandom.randint(1, aug.max_band_widths[mod]),
                                 x.shape[-1] - 1)
                start_freq = pyrandom.randint(0, x.shape[-1] - band_width - 1)
                ref = x.at[:, :, :, start_freq:start_freq + band_width].set(0.0)
            else:
                ref = x
            ok &= bool(jnp.allclose(aug_inputs[loc][mod], ref))
    assert ok, "Pallas output mismatch vs reference (p=1 path)"
    assert aug_mod_labels.shape == (b, len(locations) * len(modalities))
    assert bool(jnp.all(aug_mod_labels == 1.0))

    # Pass-through path (p = 0): no kernel launch, inputs returned unchanged.
    args_p0 = {**args, "train_mode": "supervised", "learn_framework": "none"}
    args_p0["dataset_config"] = {
        **args["dataset_config"],
        "freq_mask": {"prob": 0.0, "mask_ratio": 0.5},
    }
    aug0 = FreqMaskAugmenterPallas(args_p0)
    aug_inputs0, aug_mod_labels0, _ = aug0.forward(org_loc_inputs, labels)
    jax.block_until_ready(aug_mod_labels0)
    for loc in locations:
        for mod in modalities:
            assert aug_inputs0[loc][mod] is org_loc_inputs[loc][mod]
    assert bool(jnp.all(aug_mod_labels0 == 0.0))

    print("KERNEL_OK")
</pallas_src>

<mosaic_0001>
module attributes {stable_mosaic.version = 11 : i64} {
  func.func @_freq_mask_kernel(%arg0: i32, %arg1: i32, %arg2: memref<2xi32, #tpu.memory_space<smem>>, %arg3: memref<1x8x128xf32, #tpu.memory_space<vmem>>, %arg4: memref<1x8x128xf32, #tpu.memory_space<vmem>>) attributes {dimension_semantics = [#tpu.dimension_semantics<parallel>, #tpu.dimension_semantics<parallel>], iteration_bounds = array<i64: 1, 1>, scalar_prefetch = 1 : i64, scratch_operands = 0 : i64, tpu.core_type = #tpu.core_type<tc>, window_params = [{transform_indices = @transform_0, window_bounds = array<i64: 1, 8, 128>}, {transform_indices = @transform_1, window_bounds = array<i64: 1, 8, 128>}]} {
    %c2_i32 = arith.constant 2 : i32
    %0 = arith.muli %c2_i32, %arg0 : i32
    %1 = arith.index_cast %0 : i32 to index
    %2 = memref.load %arg2[%1] : memref<2xi32, #tpu.memory_space<smem>>
    %c2_i32_0 = arith.constant 2 : i32
    %3 = arith.muli %c2_i32_0, %arg0 : i32
    %c1_i32 = arith.constant 1 : i32
    %4 = arith.addi %3, %c1_i32 : i32
    %5 = arith.index_cast %4 : i32 to index
    %6 = memref.load %arg2[%5] : memref<2xi32, #tpu.memory_space<smem>>
    %7 = tpu.iota {dimensions = array<i32: 2>} : vector<1x1x128xi32>
    %c16_i32 = arith.constant 16 : i32
    %c0_i32 = arith.constant 0 : i32
    %8 = arith.cmpi eq, %c16_i32, %c0_i32 : i32
    %c1_i32_1 = arith.constant 1 : i32
    %9 = arith.select %8, %c1_i32_1, %c16_i32 : i32
    %10 = vector.broadcast %9 : i32 to vector<1x1x128xi32>
    %11 = arith.remsi %7, %10 : vector<1x1x128xi32>
    %c0_i32_2 = arith.constant 0 : i32
    %12 = vector.broadcast %c0_i32_2 : i32 to vector<1x1x128xi32>
    %13 = arith.cmpi ne, %11, %12 : vector<1x1x128xi32>
    %c0_i32_3 = arith.constant 0 : i32
    %14 = vector.broadcast %c0_i32_3 : i32 to vector<1x1x128xi32>
    %15 = arith.cmpi slt, %11, %14 : vector<1x1x128xi32>
    %c0_i32_4 = arith.constant 0 : i32
    %16 = arith.cmpi slt, %9, %c0_i32_4 : i32
    %17 = vector.broadcast %16 : i1 to vector<1x1x128xi1>
    %18 = vector.broadcast %17 : vector<1x1x128xi1> to vector<1x1x128xi1>
    %19 = arith.xori %15, %18 : vector<1x1x128xi1>
    %20 = arith.andi %19, %13 : vector<1x1x128xi1>
    %21 = vector.broadcast %9 : i32 to vector<1x1x128xi32>
    %22 = arith.addi %11, %21 : vector<1x1x128xi32>
    %23 = arith.select %20, %22, %11 : vector<1x1x128xi1>, vector<1x1x128xi32>
    %24 = vector.broadcast %2 : i32 to vector<1x1x128xi32>
    %25 = arith.cmpi sge, %23, %24 : vector<1x1x128xi32>
    %26 = arith.addi %2, %6 : i32
    %27 = vector.broadcast %26 : i32 to vector<1x1x128xi32>
    %28 = arith.cmpi slt, %23, %27 : vector<1x1x128xi32>
    %29 = arith.andi %25, %28 : vector<1x1x128xi1>
    %c0 = arith.constant 0 : index
    %c0_5 = arith.constant 0 : index
    %c0_6 = arith.constant 0 : index
    %30 = vector.load %arg3[%c0, %c0_5, %c0_6] : memref<1x8x128xf32, #tpu.memory_space<vmem>>, vector<1x8x128xf32>
    %cst = arith.constant 0.000000e+00 : f32
    %31 = vector.shape_cast %29 : vector<1x1x128xi1> to vector<1x1x128xi1>
    %32 = vector.broadcast %31 : vector<1x1x128xi1> to vector<1x8x128xi1>
    %33 = vector.broadcast %cst : f32 to vector<1x8x128xf32>
    %34 = arith.select %32, %33, %30 : vector<1x8x128xi1>, vector<1x8x128xf32>
    %c0_7 = arith.constant 0 : index
    %c0_8 = arith.constant 0 : index
    %c0_9 = arith.constant 0 : index
    %35 = vector.load %arg4[%c0_7, %c0_8, %c0_9] : memref<1x8x128xf32, #tpu.memory_space<vmem>>, vector<1x8x128xf32>
    tpu.vector_store %arg4[%c0_7, %c0_8, %c0_9], %34 {strides = array<i32>} : memref<1x8x128xf32, #tpu.memory_space<vmem>>, vector<1x8x128xf32>,
    return
  }
  func.func @transform_0(%arg0: i32, %arg1: i32, %arg2: memref<2xi32, #tpu.memory_space<smem>>) -> (i32, i32, i32) {
    %c0_i32 = arith.constant 0 : i32
    %c0_i32_0 = arith.constant 0 : i32
    return %arg0, %arg1, %c0_i32 : i32, i32, i32
  }
  func.func @transform_1(%arg0: i32, %arg1: i32, %arg2: memref<2xi32, #tpu.memory_space<smem>>) -> (i32, i32, i32) {
    %c0_i32 = arith.constant 0 : i32
    %c0_i32_0 = arith.constant 0 : i32
    return %arg0, %arg1, %c0_i32 : i32, i32, i32
  }
}

</mosaic_0001>

<llo_original>
// kernel: _freq_mask_group_impl.1
$region0: #{_freq_mask_group_impl.1}
  #allocation0 [shape = 'u32[]', space=smem, size = 0x4, offset = 0x4, fixed_abs, tag = 'smem constant byte address 0x4 - core index']
  #allocation1 [shape = 'u32[144,128]{1,0:T(1,128)}', space=vmem, size = 0x12000, scoped, tag = 'internal scratch']
  #allocation2 [shape = 's32[1]{0}', space=sflag, size = 0x4, scoped, tag = 'scoped memory for _freq_mask_group_impl.1']
  #allocation3 [shape = 'u8[512]{0}', space=smem, size = 0x200, scoped, tag = 'prefetched SMEM operand 0']
  %s0 = inlined_call_operand.vmem [shape: s32[2], index: 0, kind: input, shape index: {}]
  %s1 = inlined_call_operand.vmem [shape: f32[1,8,128], index: 1, kind: input, shape index: {}]
  %s2 = inlined_call_operand.vmem [shape: f32[1,8,128], index: 2, kind: output, shape index: {}]
  %s3 = sld [smem:[#allocation0]]
  $region14: #{_freq_mask_group_impl.1} parent=0
    _
  %s5 = ssub.s32 1, %s3
  %s6 = scalar_select 0, %s5, %s3
  %s7 = sshll.u32 %s0, 4
  %s8 = int_to_ptr.vmem [resolvable:$true] %s7
  %10 = dma.vmem_to_smem %s8, 16, [#allocation3], [#allocation2]
  %11 = dma.done [#allocation2], 16
  %12 = sfence
  // Predicated region
  $region2: #{_freq_mask_group_impl.1} parent=0 // pred_check
    _
  $region3: #{_freq_mask_group_impl.1} parent=0 // pred_check_branch
    %14 = sbr.rel (0) target = $region5
  $region4: #{_freq_mask_group_impl.1} parent=0 // pred_region
    _
  $region5: #{_freq_mask_group_impl.1} parent=0 // pred_fallthru
    _
  %s15 = smul.u32 0, 2
  %s16 = sld [smem:[#allocation3 + %s15]]
  %s17 = sadd.s32 %s15, 1
  %s18 = sld [smem:[#allocation3 + %s17]]
  %v19 = vlaneseq
  %v20 = vand.u32 %v19, 127
  %vm21 = vcmp.lt.s32.totalorder %v20, 0
  %v22 = vsub.s32 0, %v20
  %v23 = vsel %vm21, %v22, %v20
  %v24 = vshrl.u32 %v23, 4
  %v25 = vand.u32 %v23, 15
  %v26 = vsub.s32 0, %v25
  %v27 = vsel %vm21, %v26, %v25
  %vm28 = vcmp.ne.s32.totalorder %v27, 0
  %vm29 = vcmp.lt.s32.totalorder %v27, 0
  %vm30 = vmand %vm29, %vm28
  %v31 = vadd.s32 %v27, 16
  %v32 = vsel %vm30, %v31, %v27
  %v33 = vstv %s16
  %vm34 = vcmp.ge.s32.totalorder %v32, %v33
  %s35 = sadd.s32 %s16, %s18
  %v36 = vstv %s35
  %vm37 = vcmp.lt.s32.totalorder %v32, %v36
  %vm38 = vmand %vm34, %vm37
  %v39 = vld [vmem:[%s1] sm:$0xff]
  %v40 = vsel %vm38, 1, 0
  %vm41 = vcmp.eq.s32.totalorder %v40, 1
  %v42 = vsel %vm41, 0.0, %v39
  %43 = vst [vmem:[%s2] sm:$0xff] %v42
  // Predicated region
  $region6: #{_freq_mask_group_impl.1} parent=0 // pred_check
    _
  $region7: #{_freq_mask_group_impl.1} parent=0 // pred_check_branch
    %45 = sbr.rel (0) target = $region9
  $region8: #{_freq_mask_group_impl.1} parent=0 // pred_region
    _
  $region9: #{_freq_mask_group_impl.1} parent=0 // pred_fallthru
    _
  // Predicated region
  $region10: #{_freq_mask_group_impl.1} parent=0 // pred_check
    _
  $region11: #{_freq_mask_group_impl.1} parent=0 // pred_check_branch
    %47 = sbr.rel (0) target = $region13
  $region12: #{_freq_mask_group_impl.1} parent=0 // pred_region
    _
  $region13: #{_freq_mask_group_impl.1} parent=0 // pred_fallthru
    _

</llo_original>
